<compile_context>
chip_gen: v7x
topology: tpu7x:2x2x1
jax: 0.10.0
libtpu: 0.0.40
codegen_flags: <defaults>
</compile_context>

<pallas_src>
import functools
import math

import jax
import jax.numpy as jnp
from jax import lax
from jax.experimental import pallas as pl
from jax.experimental.pallas import tpu as pltpu


_INV_SQRT2 = 1.0 / math.sqrt(2.0)
_LANE = 128


def _round_up(x, m):
    return ((x + m - 1) // m) * m


# ----------------------------------------------------------------------------
# Pallas kernel: one K-stacked matmul (taps folded into the contraction axis),
#                folded-BN bias and exact GELU fused in the epilogue.
# ----------------------------------------------------------------------------
def _matmul_bn_act_kernel(x_ref, w_ref, b_ref, o_ref, *, apply_gelu):
    # x_ref : (1, tm, K)   im2col'd activations (bf16), K = 9 * carried-Cin (lane padded)
    # w_ref : (K, tn)      conv weights with BN scale folded in (bf16)
    # b_ref : (1, tn)      folded BN bias (f32)
    # o_ref : (1, tm, tn)  output tile (bf16 intermediate / f32 final)
    y = jnp.dot(x_ref[0], w_ref[...], preferred_element_type=jnp.float32)
    y = y + b_ref[...]
    if apply_gelu:
        # exact GELU (PyTorch nn.GELU default): 0.5 * x * (1 + erf(x / sqrt(2)))
        y = 0.5 * y * (1.0 + lax.erf(y * _INV_SQRT2))
    o_ref[0] = y.astype(o_ref.dtype)


# ----------------------------------------------------------------------------
# Wrapper glue
# ----------------------------------------------------------------------------
@functools.lru_cache(maxsize=1)
def _device_vmem_bytes():
    try:
        return int(pltpu.get_tpu_info().vmem_capacity_bytes)
    except Exception:
        return 64 << 20        # conservative fallback (v7x per-TensorCore VMEM)


def _bspec(block_shape, index_map, buffers=None):
    """BlockSpec helper; requests a given buffer depth when supported."""
    if buffers is None:
        return pl.BlockSpec(block_shape, index_map)
    try:
        return pl.BlockSpec(block_shape, index_map, pipeline_mode=pl.Buffered(buffers))
    except TypeError:          # older jax without pipeline_mode: fall back to default
        return pl.BlockSpec(block_shape, index_map)


def _pick_m_tile(m, target):
    """Largest divisor of m that is <= target and a multiple of 8 (or m itself)."""
    if m <= target:
        return m
    for t in range(target, 7, -1):
        if m % t == 0 and t % 8 == 0:
            return t
    return m                   # no nice divisor: fall back to the full extent


def _pick_n_tile(coutp, parallel_steps):
    """Split the (lane-padded) output channels only if the grid would otherwise have a
    single parallel step (keeps both v7x TensorCores busy on the last stage)."""
    if parallel_steps >= 2 or coutp <= _LANE:
        return coutp
    for t in range(coutp // 2, _LANE - 1, -1):
        if coutp % t == 0 and t % _LANE == 0:
            return t
    return coutp


def _vmem_need(tm, tn, k, ntiles, out_itemsize):
    w_bufs = 1 if ntiles == 1 else 2
    return (2 * tm * k * 2              # x tile (bf16), double buffered
            + w_bufs * k * tn * 2       # weights (bf16)
            + 2 * 8 * tn * 4            # bias (f32, sublane padded)
            + 2 * tm * tn * out_itemsize)   # output tile, double buffered


def _im2col_s2(x, kp):
    """x: (B, H, W, C) -> (B, Ho*Wo, Kp) patches of the 3x3/stride-2/pad-1 conv.
    K index = (ki*3 + kj) * C + c, zero-padded from 9*C up to Kp (lane multiple)."""
    B, H, W, C = x.shape
    assert H % 2 == 0 and W % 2 == 0, (H, W)
    Ho, Wo = H // 2, W // 2
    xp = jnp.pad(x, ((0, 0), (1, 1), (1, 1), (0, 0)))
    taps = [xp[:, ki:ki + 2 * Ho:2, kj:kj + 2 * Wo:2, :]
            for ki in range(3) for kj in range(3)]
    patches = jnp.stack(taps, axis=3).reshape(B, Ho * Wo, 9 * C)
    if kp != 9 * C:
        patches = jnp.pad(patches, ((0, 0), (0, 0), (0, kp - 9 * C)))
    return patches, Ho, Wo


def _conv_block_matmul(patches, w_k, bias_p, *, apply_gelu, out_dtype):
    """patches: (B, M, K) bf16.  w_k: (K, Coutp) bf16.  bias_p: (1, Coutp) f32.
    Returns (B, M, Coutp) in out_dtype."""
    B, M, K = patches.shape
    Kw, Coutp = w_k.shape
    assert Kw == K, (Kw, K)
    out_itemsize = jnp.dtype(out_dtype).itemsize

    cap = int(0.75 * _device_vmem_bytes())       # generation-aware VMEM ceiling
    budget = cap - (8 << 20)

    tm = _pick_m_tile(M, 512)
    while True:
        tn = _pick_n_tile(Coutp, B * (M // tm))
        need = _vmem_need(tm, tn, K, Coutp // tn, out_itemsize)
        if need <= budget or tm <= 8:
            break
        new_tm = _pick_m_tile(M, max(8, tm // 2))
        if new_tm >= tm:
            break
        tm = new_tm
    mtiles, ntiles = M // tm, Coutp // tn
    vmem_limit = int(min(cap, max(need + (8 << 20), 32 << 20)))

    flops = 2 * B * M * K * Coutp
    trans = B * M * Coutp if apply_gelu else 0
    bytes_acc = (B * M * K * 2 + K * Coutp * 2 + Coutp * 4
                 + B * M * Coutp * out_itemsize)

    kernel = functools.partial(_matmul_bn_act_kernel, apply_gelu=apply_gelu)
    const_bufs = 1 if ntiles == 1 else None      # grid-invariant: single buffer

    return pl.pallas_call(
        kernel,
        out_shape=jax.ShapeDtypeStruct((B, M, Coutp), out_dtype),
        grid=(B, mtiles, ntiles),
        in_specs=[
            pl.BlockSpec((1, tm, K), lambda b, i, j: (b, i, 0)),
            _bspec((K, tn), lambda b, i, j: (0, j), buffers=const_bufs),
            _bspec((1, tn), lambda b, i, j: (0, j), buffers=const_bufs),
        ],
        out_specs=pl.BlockSpec((1, tm, tn), lambda b, i, j: (b, i, j)),
        compiler_params=pltpu.CompilerParams(
            dimension_semantics=("parallel", "parallel", "parallel"),
            vmem_limit_bytes=vmem_limit),
        cost_estimate=pl.CostEstimate(
            flops=flops, transcendentals=trans, bytes_accessed=bytes_acc),
    )(patches, w_k, bias_p)


# ----------------------------------------------------------------------------
# Parameter construction (deterministic, in-script)
# ----------------------------------------------------------------------------
def init_conv_patch_embed(key, patch_size, in_channels, embed_dim, eps=1e-5):
    assert patch_size in (8, 16)
    if patch_size == 16:
        chans = [in_channels, embed_dim // 8, embed_dim // 4, embed_dim // 2, embed_dim]
    else:
        chans = [in_channels, embed_dim // 4, embed_dim // 2, embed_dim]

    params = []
    cin_carried = in_channels       # channels actually carried by the incoming tensor
    for cin, cout in zip(chans[:-1], chans[1:]):
        key, kw, kg, kb, km, kv = jax.random.split(key, 6)
        # conv weight in PyTorch layout (Cout, Cin, 3, 3)
        w = jax.random.normal(kw, (cout, cin, 3, 3), jnp.float32) * 0.05
        gamma = 1.0 + 0.1 * jax.random.normal(kg, (cout,), jnp.float32)
        beta = 0.1 * jax.random.normal(kb, (cout,), jnp.float32)
        r_mean = 0.1 * jax.random.normal(km, (cout,), jnp.float32)
        r_var = 0.5 + jax.random.uniform(kv, (cout,), jnp.float32)
        # fold eval-mode BN into per-channel scale/bias; fold the scale into the weight
        scale = gamma / jnp.sqrt(r_var + eps)
        bias = beta - r_mean * scale

        cout_p = _round_up(cout, _LANE)
        # (Cout, Cin, 3, 3) -> (3, 3, Cin, Cout), BN scale folded in.  Pad Cin up to the
        # channel count actually carried by the incoming tensor (lane-padded outputs of
        # the previous stage, which are exactly zero), then flatten taps+channels into
        # one contraction axis matching the im2col layout K = (ki*3 + kj)*C + c.
        w_hwio = jnp.transpose(w, (2, 3, 1, 0)) * scale
        w_hwio = jnp.pad(w_hwio, ((0, 0), (0, 0),
                                  (0, cin_carried - cin), (0, cout_p - cout)))
        w_k = w_hwio.reshape(9 * cin_carried, cout_p)
        kp = _round_up(9 * cin_carried, _LANE)
        w_k = jnp.pad(w_k, ((0, kp - 9 * cin_carried), (0, 0)))
        bias_pad = jnp.pad(bias, (0, cout_p - cout)).reshape(1, cout_p)

        params.append(dict(
            w=w, scale=scale, bias=bias,                 # f32, for the pure-JAX reference
            w_k=w_k.astype(jnp.bfloat16),                # (Kp, Cout_p) kernel weights (bf16)
            bias_p=bias_pad.astype(jnp.float32),         # (1, Cout_p) folded BN bias (f32)
            cin_carried=cin_carried, kp=kp, cout=cout, cout_p=cout_p))
        cin_carried = cout_p
    return params


# ----------------------------------------------------------------------------
# Forward (matches ConvPatchEmbed.forward)
# ----------------------------------------------------------------------------
def conv_patch_embed_forward(x_nchw, params):
    B = x_nchw.shape[0]
    x = jnp.transpose(x_nchw, (0, 2, 3, 1)).astype(jnp.bfloat16)   # NCHW -> NHWC, bf16 MXU inputs

    n = len(params)
    y, Ho, Wo = None, None, None
    for s, p in enumerate(params):
        last = (s == n - 1)
        assert x.shape[-1] == p["cin_carried"], (x.shape, p["cin_carried"])
        patches, Ho, Wo = _im2col_s2(x, p["kp"])
        # Final stage emitted in f32 for PyTorch parity (switch to bf16 if consumers allow).
        y = _conv_block_matmul(patches, p["w_k"], p["bias_p"],
                               apply_gelu=not last,
                               out_dtype=jnp.float32 if last else jnp.bfloat16)
        if not last:
            x = y.reshape(B, Ho, Wo, p["cout_p"])

    # y is already in token layout (B, Ho*Wo, Coutp); token index = h*Wo + w matches
    # PyTorch's x.flatten(2).transpose(-2, -1).  Drop channel padding (no-op if aligned).
    tokens = y[:, :, :params[-1]["cout"]]
    return tokens, (Ho, Wo)


# ----------------------------------------------------------------------------
# Pure-JAX f32 reference (for sanity checking the kernel)
# ----------------------------------------------------------------------------
def _reference_forward(x_nchw, params):
    x = jnp.transpose(x_nchw, (0, 2, 3, 1)).astype(jnp.float32)
    n = len(params)
    for i, p in enumerate(params):
        w_hwio = jnp.transpose(p["w"], (2, 3, 1, 0))
        y = lax.conv_general_dilated(
            x, w_hwio, window_strides=(2, 2), padding=((1, 1), (1, 1)),
            dimension_numbers=("NHWC", "HWIO", "NHWC"))
        y = y * p["scale"] + p["bias"]
        if i < n - 1:
            y = 0.5 * y * (1.0 + lax.erf(y * _INV_SQRT2))
        x = y
    B, Ho, Wo, C = x.shape
    return x.reshape(B, Ho * Wo, C), (Ho, Wo)


if __name__ == "__main__":
    # Small config: patch_size=8 -> 3 ConvBlock3x3 stages (stride 2 each)
    B, in_channels, img_size = 2, 3, 64
    patch_size, embed_dim = 8, 128

    key = jax.random.PRNGKey(0)
    key, kx = jax.random.split(key)
    x = jax.random.normal(kx, (B, in_channels, img_size, img_size), jnp.float32)

    params = init_conv_patch_embed(key, patch_size, in_channels, embed_dim)

    tokens, (H, W) = conv_patch_embed_forward(x, params)
    tokens = jax.block_until_ready(tokens)

    ref_tokens, (Hr, Wr) = _reference_forward(x, params)
    num_patches = (img_size // patch_size) ** 2
    assert tokens.shape == (B, num_patches, embed_dim), tokens.shape
    assert (H, W) == (Hr, Wr) == (img_size // patch_size, img_size // patch_size)
    err = float(jnp.max(jnp.abs(tokens - ref_tokens)))
    assert err < 3e-2, err   # bf16 matmul inputs vs f32 reference

    print("KERNEL_OK")
</pallas_src>

<mosaic_0001>
module attributes {stable_mosaic.version = 11 : i64} {
  func.func @_matmul_bn_act_kernel(%arg0: i32, %arg1: i32, %arg2: i32, %arg3: memref<1x512x128xbf16, #tpu.memory_space<vmem>>, %arg4: memref<128x128xbf16, #tpu.memory_space<vmem>>, %arg5: memref<1x128xf32, #tpu.memory_space<vmem>>, %arg6: memref<1x512x128xbf16, #tpu.memory_space<vmem>>) attributes {dimension_semantics = [#tpu.dimension_semantics<parallel>, #tpu.dimension_semantics<parallel>, #tpu.dimension_semantics<parallel>], iteration_bounds = array<i64: 2, 2, 1>, scalar_prefetch = 0 : i64, scratch_operands = 0 : i64, tpu.core_type = #tpu.core_type<tc>, window_params = [{transform_indices = @transform_0, window_bounds = array<i64: 1, 512, 128>}, {pipeline_mode = #tpu.pipeline_mode<synchronous>, transform_indices = @transform_1, window_bounds = array<i64: 128, 128>}, {pipeline_mode = #tpu.pipeline_mode<synchronous>, transform_indices = @transform_2, window_bounds = array<i64: 1, 128>}, {transform_indices = @transform_3, window_bounds = array<i64: 1, 512, 128>}]} {
    %c0 = arith.constant 0 : index
    %c0_0 = arith.constant 0 : index
    %c0_1 = arith.constant 0 : index
    %0 = vector.load %arg3[%c0, %c0_0, %c0_1] : memref<1x512x128xbf16, #tpu.memory_space<vmem>>, vector<1x512x128xbf16>
    %1 = vector.shape_cast %0 : vector<1x512x128xbf16> to vector<512x128xbf16>
    %c0_2 = arith.constant 0 : index
    %c0_3 = arith.constant 0 : index
    %2 = vector.load %arg4[%c0_2, %c0_3] : memref<128x128xbf16, #tpu.memory_space<vmem>>, vector<128x128xbf16>
    %cst = arith.constant dense<0.000000e+00> : vector<512x128xf32>
    %3 = tpu.matmul %1, %2, %cst {dimension_numbers = #tpu.dot_dimension_numbers<[1], [0], [0], [1], [0, 0, 1, 1], [], []>} : vector<512x128xbf16>, vector<128x128xbf16>, vector<512x128xf32> -> vector<512x128xf32>
    %c0_4 = arith.constant 0 : index
    %c0_5 = arith.constant 0 : index
    %4 = vector.load %arg5[%c0_4, %c0_5] : memref<1x128xf32, #tpu.memory_space<vmem>>, vector<1x128xf32>
    %5 = vector.broadcast %4 : vector<1x128xf32> to vector<512x128xf32>
    %6 = arith.addf %3, %5 : vector<512x128xf32>
    %cst_6 = arith.constant 5.000000e-01 : f32
    %7 = vector.broadcast %cst_6 : f32 to vector<512x128xf32>
    %8 = arith.mulf %7, %6 : vector<512x128xf32>
    %cst_7 = arith.constant 0.707106769 : f32
    %9 = vector.broadcast %cst_7 : f32 to vector<512x128xf32>
    %10 = arith.mulf %6, %9 : vector<512x128xf32>
    %11 = math.erf %10 : vector<512x128xf32>
    %cst_8 = arith.constant 1.000000e+00 : f32
    %12 = vector.broadcast %cst_8 : f32 to vector<512x128xf32>
    %13 = arith.addf %12, %11 : vector<512x128xf32>
    %14 = arith.mulf %8, %13 : vector<512x128xf32>
    %15 = arith.truncf %14 : vector<512x128xf32> to vector<512x128xbf16>
    %c0_9 = arith.constant 0 : index
    %c0_10 = arith.constant 0 : index
    %c0_11 = arith.constant 0 : index
    %16 = vector.load %arg6[%c0_9, %c0_10, %c0_11] : memref<1x512x128xbf16, #tpu.memory_space<vmem>>, vector<1x512x128xbf16>
    %17 = vector.shape_cast %16 : vector<1x512x128xbf16> to vector<512x128xbf16>
    %18 = vector.shape_cast %15 : vector<512x128xbf16> to vector<1x512x128xbf16>
    tpu.vector_store %arg6[%c0_9, %c0_10, %c0_11], %18 {strides = array<i32>} : memref<1x512x128xbf16, #tpu.memory_space<vmem>>, vector<1x512x128xbf16>,
    return
  }
  func.func @transform_0(%arg0: i32, %arg1: i32, %arg2: i32) -> (i32, i32, i32) {
    %c0_i32 = arith.constant 0 : i32
    %c0_i32_0 = arith.constant 0 : i32
    return %arg0, %arg1, %c0_i32 : i32, i32, i32
  }
  func.func @transform_1(%arg0: i32, %arg1: i32, %arg2: i32) -> (i32, i32) {
    %c0_i32 = arith.constant 0 : i32
    %c0_i32_0 = arith.constant 0 : i32
    return %c0_i32, %arg2 : i32, i32
  }
  func.func @transform_2(%arg0: i32, %arg1: i32, %arg2: i32) -> (i32, i32) {
    %c0_i32 = arith.constant 0 : i32
    %c0_i32_0 = arith.constant 0 : i32
    return %c0_i32, %arg2 : i32, i32
  }
  func.func @transform_3(%arg0: i32, %arg1: i32, %arg2: i32) -> (i32, i32, i32) {
    %c0_i32 = arith.constant 0 : i32
    return %arg0, %arg1, %arg2 : i32, i32, i32
  }
}

</mosaic_0001>

<llo_original>
// kernel: tpu_custom_call.1
$region0: #{tpu_custom_call.1}
  #allocation0 [shape = 'u32[]', space=smem, size = 0x4, offset = 0x4, fixed_abs, tag = 'smem constant byte address 0x4 - core index']
  #allocation1 [shape = 'u32[144,128]{1,0:T(1,128)}', space=vmem, size = 0x12000, scoped, tag = 'internal scratch']
  %s0 = inlined_call_operand.hbm [shape: bf16[2,1024,128], index: 0, kind: input, shape index: {}]
  %s1 = inlined_call_operand.hbm [shape: bf16[128,128], index: 1, kind: input, shape index: {}]
  %s2 = inlined_call_operand.vmem [shape: f32[1,128], index: 2, kind: input, shape index: {}]
  %s3 = inlined_call_operand.hbm [shape: bf16[2,1024,128], index: 3, kind: output, shape index: {}]
  %s4 = sld [smem:[#allocation0]]
  $region53: #{tpu_custom_call.1} parent=0
    _
  %s6 = ssub.s32 1, %s4
  %s7 = scalar_select 0, %s6, %s4
  $region1: #{tpu_custom_call.1} parent=0
    #allocation2 [shape = 'u8[262144]{0}', space=vmem, size = 0x40000, scoped, tag = 'input window, operand 0']
    #allocation3 [shape = 's32[2]{0}', space=sflag, size = 0x8, scoped, tag = 'scoped memory for tpu_custom_call.1']
    #allocation4 [shape = 's32[2]{0}', space=sflag, size = 0x8, scoped, tag = 'scoped memory for tpu_custom_call.1']
    #allocation5 [shape = 'u8[32768]{0}', space=vmem, size = 0x8000, scoped, tag = 'input window, operand 1, single buffered']
    #allocation6 [shape = 's32[1]{0}', space=sflag, size = 0x4, scoped, tag = 'scoped memory for tpu_custom_call.1']
    #allocation7 [shape = 'u8[262144]{0}', space=vmem, size = 0x40000, scoped, tag = 'output window, operand 0']
    %8 = vsyncpa [#allocation3], 0
    %s9 = scalar_lea.sflag [#allocation3], 1
    %10 = vsyncpa %s9, 0
    %11 = vsyncpa [#allocation6], 0
    %12 = vsyncpa [#allocation4], 0
    %s13 = scalar_lea.sflag [#allocation4], 1
    %14 = vsyncpa %s13, 0
    loop: start=0, step=1, limit=6
    $region2: #{tpu_custom_call.1} parent=1 // loop_pre_header
      _
    $region3: #{tpu_custom_call.1} parent=1 // loop_header
      %s16 = sphi 0, %s20
      %p17 = scmp.ge.s32.totalorder %s16, 6
      %s23 = sphi 0, %s42
      %s24 = sphi 0, %s38
      %s25 = sphi 0, %s34
      %s26 = sphi 0, %s23
      %s27 = sphi 0, %s24
      %s28 = sphi 0, %s25
      %s29 = sphi 0, %s26
      %s30 = sphi 0, %s27
      %s31 = sphi 0, %s28
      %s47 = sphi 0, %s49
      %s50 = sphi 0, %s47
      %s51 = sphi 0, %s50
      %s67 = sphi 0, %s51
      %s73 = sphi 0, %s75
      %s76 = sphi 0, %s73
      %s77 = sphi 0, %s76
      %s93 = sphi 0, %s77
      %s99 = sphi 0, %s101
      %s102 = sphi 0, %s99
      %s103 = sphi 0, %s102
      %s119 = sphi 0, %s103
      %s129 = sphi 0, %s131
      %s132 = sphi 0, %s129
      %s133 = sphi 0, %s132
      %s149 = sphi 0, %s133
    $region4: #{tpu_custom_call.1} parent=1 // loop_header_branch
      %19 = sbr.rel (%p17) target = $region8
    $region5: #{tpu_custom_call.1} parent=1 // loop_body
      %s21 = ssub.s32 %s16, 1
      %s22 = ssub.s32 %s16, 2
      %s32 = sadd.s32 1, %s25
      %p33 = scmp.ge.s32.totalorder %s32, 1
      %s34 = scalar_select %p33, 0, %s32
      %s35 = sadd.s32 1, %s24
      %s36 = scalar_select %p33, %s35, %s24
      %p37 = scmp.ge.s32.totalorder %s36, 2
      %s38 = scalar_select %p37, 0, %s36
      %s39 = sadd.s32 1, %s23
      %s40 = scalar_select %p37, %s39, %s23
      %p41 = scmp.ge.s32.totalorder %s40, 2
      %s42 = scalar_select %p41, 0, %s40
      %s43 = ssub.s32 %s23, %s42
      %s44 = ssub.s32 %s24, %s38
      %s45 = sor.u32 %s43, %s44
      %p46 = scmp.eq.s32.totalorder %s45, 0
      %s48 = sadd.s32 %s47, 1
      %s49 = scalar_select %p46, %s47, %s48
      %p52 = pneg %p46
      %p53 = scmp.eq.s32.totalorder %s16, 3
      %p54 = por %p52, %p53
      %p55 = scmp.ne.s32.totalorder %s47, %s50
      %p56 = scmp.eq.s32.totalorder %s16, 0
      %p57 = por %p55, %p56
      %p58 = scmp.ne.s32.totalorder %s47, %s50
      %p59 = scmp.eq.s32.totalorder %s21, 3
      %p60 = por %p58, %p59
      %p61 = scmp.ne.s32.totalorder %s50, %s51
      %p62 = scmp.eq.s32.totalorder %s21, 0
      %p63 = por %p61, %p62
      %p64 = scmp.ne.s32.totalorder %s50, %s51
      %p65 = scmp.eq.s32.totalorder %s22, 3
      %p66 = por %p64, %p65
      %p68 = scmp.ne.s32.totalorder %s51, %s67
      %p69 = scmp.eq.s32.totalorder %s22, 0
      %p70 = por %p68, %p69
      %s71 = ssub.s32 %s25, %s34
      %p72 = scmp.eq.s32.totalorder %s71, 0
      %s74 = sadd.s32 %s73, 1
      %s75 = scalar_select %p72, %s73, %s74
      %p78 = pneg %p72
      %p79 = scmp.eq.s32.totalorder %s16, 3
      %p80 = por %p78, %p79
      %p81 = scmp.ne.s32.totalorder %s73, %s76
      %p82 = scmp.eq.s32.totalorder %s16, 0
      %p83 = por %p81, %p82
      %p84 = scmp.ne.s32.totalorder %s73, %s76
      %p85 = scmp.eq.s32.totalorder %s21, 3
      %p86 = por %p84, %p85
      %p87 = scmp.ne.s32.totalorder %s76, %s77
      %p88 = scmp.eq.s32.totalorder %s21, 0
      %p89 = por %p87, %p88
      %p90 = scmp.ne.s32.totalorder %s76, %s77
      %p91 = scmp.eq.s32.totalorder %s22, 3
      %p92 = por %p90, %p91
      %p94 = scmp.ne.s32.totalorder %s77, %s93
      %p95 = scmp.eq.s32.totalorder %s22, 0
      %p96 = por %p94, %p95
      %s97 = ssub.s32 %s25, %s34
      %p98 = scmp.eq.s32.totalorder %s97, 0
      %s100 = sadd.s32 %s99, 1
      %s101 = scalar_select %p98, %s99, %s100
      %p104 = pneg %p98
      %p105 = scmp.eq.s32.totalorder %s16, 3
      %p106 = por %p104, %p105
      %p107 = scmp.ne.s32.totalorder %s99, %s102
      %p108 = scmp.eq.s32.totalorder %s16, 0
      %p109 = por %p107, %p108
      %p110 = scmp.ne.s32.totalorder %s99, %s102
      %p111 = scmp.eq.s32.totalorder %s21, 3
      %p112 = por %p110, %p111
      %p113 = scmp.ne.s32.totalorder %s102, %s103
      %p114 = scmp.eq.s32.totalorder %s21, 0
      %p115 = por %p113, %p114
      %p116 = scmp.ne.s32.totalorder %s102, %s103
      %p117 = scmp.eq.s32.totalorder %s22, 3
      %p118 = por %p116, %p117
      %p120 = scmp.ne.s32.totalorder %s103, %s119
      %p121 = scmp.eq.s32.totalorder %s22, 0
      %p122 = por %p120, %p121
      %s123 = ssub.s32 %s23, %s42
      %s124 = ssub.s32 %s24, %s38
      %s125 = sor.u32 %s123, %s124
      %s126 = ssub.s32 %s25, %s34
      %s127 = sor.u32 %s125, %s126
      %p128 = scmp.eq.s32.totalorder %s127, 0
      %s130 = sadd.s32 %s129, 1
      %s131 = scalar_select %p128, %s129, %s130
      %p134 = pneg %p128
      %p135 = scmp.eq.s32.totalorder %s16, 3
      %p136 = por %p134, %p135
      %p137 = scmp.ne.s32.totalorder %s129, %s132
      %p138 = scmp.eq.s32.totalorder %s16, 0
      %p139 = por %p137, %p138
      %p140 = scmp.ne.s32.totalorder %s129, %s132
      %p141 = scmp.eq.s32.totalorder %s21, 3
      %p142 = por %p140, %p141
      %p143 = scmp.ne.s32.totalorder %s132, %s133
      %p144 = scmp.eq.s32.totalorder %s21, 0
      %p145 = por %p143, %p144
      %p146 = scmp.ne.s32.totalorder %s132, %s133
      %p147 = scmp.eq.s32.totalorder %s22, 3
      %p148 = por %p146, %p147
      %p150 = scmp.ne.s32.totalorder %s133, %s149
      %p151 = scmp.eq.s32.totalorder %s22, 0
      %p152 = por %p150, %p151
      %p153 = scmp.le.s32.totalorder 1, %s16
      %p154 = scmp.lt.s32.totalorder %s16, 5
      %p155 = pnand %p153, %p154
      %p156 = pneg %p155
      // Predicated region
      $region9: #{tpu_custom_call.1} parent=5 // pred_check
        _
      $region10: #{tpu_custom_call.1} parent=5 // pred_check_branch
        %158 = sbr.rel (%p155) target = $region12
      $region11: #{tpu_custom_call.1} parent=5 // pred_region
        %s159 = ssub.s32 %s16, 1
        // Predicated region
        $region13: #{tpu_custom_call.1} parent=11 // pred_check
          %p160 = pneg %p89
        $region14: #{tpu_custom_call.1} parent=11 // pred_check_branch
          %162 = sbr.rel (%p160) target = $region16
        $region15: #{tpu_custom_call.1} parent=11 // pred_region
          %s164 = ssub.s32 1024, 1024
          %165 = vsyncadd [#allocation6], %s164
          %s166 = smul.addr %s28, 64
          %s167 = scalar_lea.hbm %s1, %s166
          %s168 = sshll.u32 [#allocation5], 4
          %s169 = int_to_ptr.vmem [resolvable:$true] %s168
          %174 = dma.hbm_to_vmem [thread:$0]  %s167, 1024, %s169, [#allocation6], 64, 64, 4
        $region16: #{tpu_custom_call.1} parent=11 // pred_fallthru
          _
        // Predicated region
        $region17: #{tpu_custom_call.1} parent=11 // pred_check
          %p175 = pneg %p115
        $region18: #{tpu_custom_call.1} parent=11 // pred_check_branch
          %177 = sbr.rel (%p175) target = $region20
        $region19: #{tpu_custom_call.1} parent=11 // pred_region
          %p178 = scmp.lt.s32.totalorder %s28, 0
          %s179 = scalar_select %p178, %s28, 0
          %s180 = scalar_lea.vmem %s2, %s179
        $region20: #{tpu_custom_call.1} parent=11 // pred_fallthru
          _
      $region12: #{tpu_custom_call.1} parent=5 // pred_fallthru
        _
      %p181 = scmp.lt.s32.totalorder %s16, 4
      // Predicated region
      $region21: #{tpu_custom_call.1} parent=5 // pred_check
        %p182 = pneg %p181
      $region22: #{tpu_custom_call.1} parent=5 // pred_check_branch
        %184 = sbr.rel (%p182) target = $region24
      $region23: #{tpu_custom_call.1} parent=5 // pred_region
        // Predicated region
        $region25: #{tpu_custom_call.1} parent=23 // pred_check
          %p185 = pneg %p57
        $region26: #{tpu_custom_call.1} parent=23 // pred_check_branch
          %187 = sbr.rel (%p185) target = $region28
        $region27: #{tpu_custom_call.1} parent=23 // pred_region
          %s188 = sand.u32 %s47, 1
          %s189 = scalar_lea.sflag [#allocation3], %s188
          %s190 = sand.u32 %s47, 1
          %s191 = smul.addr %s190, 256
          %s192 = scalar_lea.vmem [#allocation2], %s191
          %s193 = smul.u32 64, %s24
          %s195 = ssub.s32 4096, 4096
          %196 = vsyncadd %s189, %s195
          %s197 = smul.addr %s23, 128
          %s198 = sadd.s32 %s193, %s197
          %s199 = smul.addr %s198, 64
          %s200 = scalar_lea.hbm %s0, %s199
          %s201 = sshll.u32 %s192, 4
          %s202 = int_to_ptr.vmem [resolvable:$true] %s201
          %207 = dma.hbm_to_vmem [thread:$0]  %s200, 4096, %s202, %s189, 64, 64, 4
        $region28: #{tpu_custom_call.1} parent=23 // pred_fallthru
          _
      $region24: #{tpu_custom_call.1} parent=5 // pred_fallthru
        _
      %p208 = scmp.le.s32.totalorder 1, %s16
      %p209 = scmp.lt.s32.totalorder %s16, 5
      %p210 = pnand %p208, %p209
      %p211 = pneg %p210
      // Predicated region
      $region29: #{tpu_custom_call.1} parent=5 // pred_check
        _
      $region30: #{tpu_custom_call.1} parent=5 // pred_check_branch
        %213 = sbr.rel (%p210) target = $region32
      $region31: #{tpu_custom_call.1} parent=5 // pred_region
        %s214 = ssub.s32 %s16, 1
        %s215 = sand.u32 %s50, 1
        %s216 = scalar_lea.sflag [#allocation3], %s215
        %s217 = sand.u32 %s50, 1
        %s218 = smul.addr %s217, 256
        %s219 = scalar_lea.vmem [#allocation2], %s218
        // Predicated region
        $region33: #{tpu_custom_call.1} parent=31 // pred_check
          %p220 = pneg %p63
        $region34: #{tpu_custom_call.1} parent=31 // pred_check_branch
          %222 = sbr.rel (%p220) target = $region36
        $region35: #{tpu_custom_call.1} parent=31 // pred_region
          %223 = dma.done %s216, 4096
        $region36: #{tpu_custom_call.1} parent=31 // pred_fallthru
          _
        // Predicated region
        $region37: #{tpu_custom_call.1} parent=31 // pred_check
          %p224 = pneg %p89
        $region38: #{tpu_custom_call.1} parent=31 // pred_check_branch
          %226 = sbr.rel (%p224) target = $region40
        $region39: #{tpu_custom_call.1} parent=31 // pred_region
          %227 = dma.done [#allocation6], 1024
        $region40: #{tpu_custom_call.1} parent=31 // pred_fallthru
          _
        %s228 = sand.u32 %s50, 1
        %s229 = scalar_lea.sflag [#allocation3], %s228
        %s230 = sand.u32 %s50, 1
        %s231 = smul.addr %s230, 256
        %s232 = scalar_lea.vmem [#allocation2], %s231
        %p233 = pneg %p63
        %p234 = pneg %p60
        %p235 = pneg %p89
        %p236 = pneg %p86
        %p237 = scmp.lt.s32.totalorder %s28, 0
        %s238 = scalar_select %p237, %s28, 0
        %s239 = scalar_lea.vmem %s2, %s238
        %p240 = pneg %p115
        %p241 = pneg %p112
        %p242 = pneg %p145
        %p243 = pneg %p142
        %s244 = sand.u32 %s132, 1
        %s245 = scalar_lea.sflag [#allocation4], %s244
        %s246 = sand.u32 %s132, 1
        %s247 = smul.addr %s246, 256
        %s248 = scalar_lea.vmem [#allocation7], %s247
        %s249 = smul.u32 64, %s27
        %p250 = scmp.lt.s32.totalorder %s28, 0
        %s251 = scalar_select %p250, %s28, 0
        %s252 = scalar_lea.vmem %s2, %s251
        %s253 = smul.u32 64, %s27
        %v255 = vld [vmem:[%s219] sm:$0xf]
        %v256 = vld [vmem:[%s219 + $0x4] sm:$0xf]
        %v257 = vld [vmem:[%s219 + $0x8] sm:$0xf]
        %v258 = vld [vmem:[%s219 + $0xc] sm:$0xf]
        %v259 = vld [vmem:[%s219 + $0x10] sm:$0xf]
        %v260 = vld [vmem:[%s219 + $0x14] sm:$0xf]
        %v261 = vld [vmem:[%s219 + $0x18] sm:$0xf]
        %v262 = vld [vmem:[%s219 + $0x1c] sm:$0xf]
        %v263 = vld [vmem:[%s219 + $0x20] sm:$0xf]
        %v264 = vld [vmem:[%s219 + $0x24] sm:$0xf]
        %v265 = vld [vmem:[%s219 + $0x28] sm:$0xf]
        %v266 = vld [vmem:[%s219 + $0x2c] sm:$0xf]
        %v267 = vld [vmem:[%s219 + $0x30] sm:$0xf]
        %v268 = vld [vmem:[%s219 + $0x34] sm:$0xf]
        %v269 = vld [vmem:[%s219 + $0x38] sm:$0xf]
        %v270 = vld [vmem:[%s219 + $0x3c] sm:$0xf]
        %v271 = vld [vmem:[%s219 + $0x40] sm:$0xf]
        %v272 = vld [vmem:[%s219 + $0x44] sm:$0xf]
        %v273 = vld [vmem:[%s219 + $0x48] sm:$0xf]
        %v274 = vld [vmem:[%s219 + $0x4c] sm:$0xf]
        %v275 = vld [vmem:[%s219 + $0x50] sm:$0xf]
        %v276 = vld [vmem:[%s219 + $0x54] sm:$0xf]
        %v277 = vld [vmem:[%s219 + $0x58] sm:$0xf]
        %v278 = vld [vmem:[%s219 + $0x5c] sm:$0xf]
        %v279 = vld [vmem:[%s219 + $0x60] sm:$0xf]
        %v280 = vld [vmem:[%s219 + $0x64] sm:$0xf]
        %v281 = vld [vmem:[%s219 + $0x68] sm:$0xf]
        %v282 = vld [vmem:[%s219 + $0x6c] sm:$0xf]
        %v283 = vld [vmem:[%s219 + $0x70] sm:$0xf]
        %v284 = vld [vmem:[%s219 + $0x74] sm:$0xf]
        %v285 = vld [vmem:[%s219 + $0x78] sm:$0xf]
        %v286 = vld [vmem:[%s219 + $0x7c] sm:$0xf]
        %v287 = vld [vmem:[%s219 + $0x80] sm:$0xf]
        %v288 = vld [vmem:[%s219 + $0x84] sm:$0xf]
        %v289 = vld [vmem:[%s219 + $0x88] sm:$0xf]
        %v290 = vld [vmem:[%s219 + $0x8c] sm:$0xf]
        %v291 = vld [vmem:[%s219 + $0x90] sm:$0xf]
        %v292 = vld [vmem:[%s219 + $0x94] sm:$0xf]
        %v293 = vld [vmem:[%s219 + $0x98] sm:$0xf]
        %v294 = vld [vmem:[%s219 + $0x9c] sm:$0xf]
        %v295 = vld [vmem:[%s219 + $0xa0] sm:$0xf]
        %v296 = vld [vmem:[%s219 + $0xa4] sm:$0xf]
        %v297 = vld [vmem:[%s219 + $0xa8] sm:$0xf]
        %v298 = vld [vmem:[%s219 + $0xac] sm:$0xf]
        %v299 = vld [vmem:[%s219 + $0xb0] sm:$0xf]
        %v300 = vld [vmem:[%s219 + $0xb4] sm:$0xf]
        %v301 = vld [vmem:[%s219 + $0xb8] sm:$0xf]
        %v302 = vld [vmem:[%s219 + $0xbc] sm:$0xf]
        %v303 = vld [vmem:[%s219 + $0xc0] sm:$0xf]
        %v304 = vld [vmem:[%s219 + $0xc4] sm:$0xf]
        %v305 = vld [vmem:[%s219 + $0xc8] sm:$0xf]
        %v306 = vld [vmem:[%s219 + $0xcc] sm:$0xf]
        %v307 = vld [vmem:[%s219 + $0xd0] sm:$0xf]
        %v308 = vld [vmem:[%s219 + $0xd4] sm:$0xf]
        %v309 = vld [vmem:[%s219 + $0xd8] sm:$0xf]
        %v310 = vld [vmem:[%s219 + $0xdc] sm:$0xf]
        %v311 = vld [vmem:[%s219 + $0xe0] sm:$0xf]
        %v312 = vld [vmem:[%s219 + $0xe4] sm:$0xf]
        %v313 = vld [vmem:[%s219 + $0xe8] sm:$0xf]
        %v314 = vld [vmem:[%s219 + $0xec] sm:$0xf]
        %v315 = vld [vmem:[%s219 + $0xf0] sm:$0xf]
        %v316 = vld [vmem:[%s219 + $0xf4] sm:$0xf]
        %v317 = vld [vmem:[%s219 + $0xf8] sm:$0xf]
        %v318 = vld [vmem:[%s219 + $0xfc] sm:$0xf]
        %v319 = vld [vmem:[#allocation5] sm:$0xf]
        %v320 = vld [vmem:[#allocation5 + $0x4] sm:$0xf]
        %v321 = vld [vmem:[#allocation5 + $0x8] sm:$0xf]
        %v322 = vld [vmem:[#allocation5 + $0xc] sm:$0xf]
        %v323 = vld [vmem:[#allocation5 + $0x10] sm:$0xf]
        %v324 = vld [vmem:[#allocation5 + $0x14] sm:$0xf]
        %v325 = vld [vmem:[#allocation5 + $0x18] sm:$0xf]
        %v326 = vld [vmem:[#allocation5 + $0x1c] sm:$0xf]
        %v327 = vld [vmem:[#allocation5 + $0x20] sm:$0xf]
        %v328 = vld [vmem:[#allocation5 + $0x24] sm:$0xf]
        %v329 = vld [vmem:[#allocation5 + $0x28] sm:$0xf]
        %v330 = vld [vmem:[#allocation5 + $0x2c] sm:$0xf]
        %v331 = vld [vmem:[#allocation5 + $0x30] sm:$0xf]
        %v332 = vld [vmem:[#allocation5 + $0x34] sm:$0xf]
        %v333 = vld [vmem:[#allocation5 + $0x38] sm:$0xf]
        %v334 = vld [vmem:[#allocation5 + $0x3c] sm:$0xf]
        %v335 = vld [vmem:[%s252] sm:$0x1]
        %v337 = vlaneseq
        %v338 = vshrl.u32 %v337, 7
        %v339 = vsub.s32 0, %v338
        %v340 = vrot.slane %v335, %v339
        %v406 = vunpack.c.l.b16 %v255
        %v407 = vunpack.c.l.b16 %v256
        %v408 = vunpack.c.l.b16 %v257
        %v409 = vunpack.c.l.b16 %v258
        %v410 = vunpack.c.l.b16 %v259
        %v411 = vunpack.c.l.b16 %v260
        %v412 = vunpack.c.l.b16 %v261
        %v413 = vunpack.c.l.b16 %v262
        %v414 = vunpack.c.l.b16 %v263
        %v415 = vunpack.c.l.b16 %v264
        %v416 = vunpack.c.l.b16 %v265
        %v417 = vunpack.c.l.b16 %v266
        %v418 = vunpack.c.l.b16 %v267
        %v419 = vunpack.c.l.b16 %v268
        %v420 = vunpack.c.l.b16 %v269
        %v421 = vunpack.c.l.b16 %v270
        %v422 = vunpack.c.l.b16 %v271
        %v423 = vunpack.c.l.b16 %v272
        %v424 = vunpack.c.l.b16 %v273
        %v425 = vunpack.c.l.b16 %v274
        %v426 = vunpack.c.l.b16 %v275
        %v427 = vunpack.c.l.b16 %v276
        %v428 = vunpack.c.l.b16 %v277
        %v429 = vunpack.c.l.b16 %v278
        %v430 = vunpack.c.l.b16 %v279
        %v431 = vunpack.c.l.b16 %v280
        %v432 = vunpack.c.l.b16 %v281
        %v433 = vunpack.c.l.b16 %v282
        %v434 = vunpack.c.l.b16 %v283
        %v435 = vunpack.c.l.b16 %v284
        %v436 = vunpack.c.l.b16 %v285
        %v437 = vunpack.c.l.b16 %v286
        %v438 = vunpack.c.l.b16 %v287
        %v439 = vunpack.c.l.b16 %v288
        %v440 = vunpack.c.l.b16 %v289
        %v441 = vunpack.c.l.b16 %v290
        %v442 = vunpack.c.l.b16 %v291
        %v443 = vunpack.c.l.b16 %v292
        %v444 = vunpack.c.l.b16 %v293
        %v445 = vunpack.c.l.b16 %v294
        %v446 = vunpack.c.l.b16 %v295
        %v447 = vunpack.c.l.b16 %v296
        %v448 = vunpack.c.l.b16 %v297
        %v449 = vunpack.c.l.b16 %v298
        %v450 = vunpack.c.l.b16 %v299
        %v451 = vunpack.c.l.b16 %v300
        %v452 = vunpack.c.l.b16 %v301
        %v453 = vunpack.c.l.b16 %v302
        %v454 = vunpack.c.l.b16 %v303
        %v455 = vunpack.c.l.b16 %v304
        %v456 = vunpack.c.l.b16 %v305
        %v457 = vunpack.c.l.b16 %v306
        %v458 = vunpack.c.l.b16 %v307
        %v459 = vunpack.c.l.b16 %v308
        %v460 = vunpack.c.l.b16 %v309
        %v461 = vunpack.c.l.b16 %v310
        %v462 = vunpack.c.l.b16 %v311
        %v463 = vunpack.c.l.b16 %v312
        %v464 = vunpack.c.l.b16 %v313
        %v465 = vunpack.c.l.b16 %v314
        %v466 = vunpack.c.l.b16 %v315
        %v467 = vunpack.c.l.b16 %v316
        %v468 = vunpack.c.l.b16 %v317
        %v469 = vunpack.c.l.b16 %v318
        %v470 = vpack.c.b16 %v407, %v406
        %v471 = vpack.c.b16 %v409, %v408
        %v472 = vpack.c.b16 %v411, %v410
        %v473 = vpack.c.b16 %v413, %v412
        %v474 = vpack.c.b16 %v415, %v414
        %v475 = vpack.c.b16 %v417, %v416
        %v476 = vpack.c.b16 %v419, %v418
        %v477 = vpack.c.b16 %v421, %v420
        %v478 = vpack.c.b16 %v423, %v422
        %v479 = vpack.c.b16 %v425, %v424
        %v480 = vpack.c.b16 %v427, %v426
        %v481 = vpack.c.b16 %v429, %v428
        %v482 = vpack.c.b16 %v431, %v430
        %v483 = vpack.c.b16 %v433, %v432
        %v484 = vpack.c.b16 %v435, %v434
        %v485 = vpack.c.b16 %v437, %v436
        %v486 = vpack.c.b16 %v439, %v438
        %v487 = vpack.c.b16 %v441, %v440
        %v488 = vpack.c.b16 %v443, %v442
        %v489 = vpack.c.b16 %v445, %v444
        %v490 = vpack.c.b16 %v447, %v446
        %v491 = vpack.c.b16 %v449, %v448
        %v492 = vpack.c.b16 %v451, %v450
        %v493 = vpack.c.b16 %v453, %v452
        %v494 = vpack.c.b16 %v455, %v454
        %v495 = vpack.c.b16 %v457, %v456
        %v496 = vpack.c.b16 %v459, %v458
        %v497 = vpack.c.b16 %v461, %v460
        %v498 = vpack.c.b16 %v463, %v462
        %v499 = vpack.c.b16 %v465, %v464
        %v500 = vpack.c.b16 %v467, %v466
        %v501 = vpack.c.b16 %v469, %v468
        %v550 = vunpack.c.l.b16 %v319
        %v551 = vunpack.c.l.b16 %v320
        %v552 = vunpack.c.l.b16 %v321
        %v553 = vunpack.c.l.b16 %v322
        %v554 = vunpack.c.l.b16 %v323
        %v555 = vunpack.c.l.b16 %v324
        %v556 = vunpack.c.l.b16 %v325
        %v557 = vunpack.c.l.b16 %v326
        %v558 = vunpack.c.l.b16 %v327
        %v559 = vunpack.c.l.b16 %v328
        %v560 = vunpack.c.l.b16 %v329
        %v561 = vunpack.c.l.b16 %v330
        %v562 = vunpack.c.l.b16 %v331
        %v563 = vunpack.c.l.b16 %v332
        %v564 = vunpack.c.l.b16 %v333
        %v565 = vunpack.c.l.b16 %v334
        %v566 = vpack.c.b16 %v551, %v550
        %v567 = vpack.c.b16 %v553, %v552
        %v568 = vpack.c.b16 %v555, %v554
        %v569 = vpack.c.b16 %v557, %v556
        %v570 = vpack.c.b16 %v559, %v558
        %v571 = vpack.c.b16 %v561, %v560
        %v572 = vpack.c.b16 %v563, %v562
        %v573 = vpack.c.b16 %v565, %v564
        %582 = vmatprep.subr.bf16.mxu0 0
        %583 = vmatpush1.bf16.msra.mxu0 %v566
        %584 = vmatprep.subr.bf16.mxu0 0
        %585 = vmatpush1.bf16.msra.mxu0 %v567
        %586 = vmatprep.subr.bf16.mxu0 0
        %587 = vmatpush1.bf16.msra.mxu0 %v568
        %588 = vmatprep.subr.bf16.mxu0 0
        %589 = vmatpush1.bf16.msra.mxu0 %v569
        %590 = vmatprep.subr.bf16.mxu0 0
        %591 = vmatpush1.bf16.msra.mxu0 %v570
        %592 = vmatprep.subr.bf16.mxu0 0
        %593 = vmatpush1.bf16.msra.mxu0 %v571
        %594 = vmatprep.subr.bf16.mxu0 0
        %595 = vmatpush1.bf16.msra.mxu0 %v572
        %596 = vmatprep.subr.bf16.mxu0 0
        %597 = vmatpush1.bf16.msra.mxu0 %v573
        %598 = vmatprep.subr.bf16.mxu0 0
        %599 = vmatpush1.bf16.msra.mxu0 0
        %600 = vmatprep.subr.bf16.mxu0 0
        %601 = vmatpush1.bf16.msra.mxu0 0
        %602 = vmatprep.subr.bf16.mxu0 0
        %603 = vmatpush1.bf16.msra.mxu0 0
        %604 = vmatprep.subr.bf16.mxu0 0
        %605 = vmatpush1.bf16.msra.mxu0 0
        %606 = vmatprep.subr.bf16.mxu0 0
        %607 = vmatpush1.bf16.msra.mxu0 0
        %608 = vmatprep.subr.bf16.mxu0 0
        %609 = vmatpush1.bf16.msra.mxu0 0
        %610 = vmatprep.subr.bf16.mxu0 0
        %611 = vmatpush1.bf16.msra.mxu0 0
        %612 = vmatprep.subr.bf16.mxu0 0
        %613 = vmatpush1.bf16.msra.mxu0 0
        %614 = vmatprep.mubr.bf16.mxu0 0
        %615 = vmatmul.mubr.bf16.gmra.mrb[0].mxu0 %v470
        %v616 = vpop.f32.mrb[0].mxu0
        %v617 = vadd.f32 %v340, %v616
        %v618 = vpop.f32.mrb[0].mxu0
        %v619 = vpop.f32.mrb[0].mxu0
        %v620 = vadd.f32 %v340, %v619
        %v621 = vpop.f32.mrb[0].mxu0
        %622 = vmatprep.mubr.bf16.mxu0 0
        %623 = vmatmul.mubr.bf16.gmra.mrb[0].mxu0 %v471
        %v624 = vpop.f32.mrb[0].mxu0
        %v625 = vadd.f32 %v340, %v624
        %v626 = vpop.f32.mrb[0].mxu0
        %v627 = vpop.f32.mrb[0].mxu0
        %v628 = vadd.f32 %v340, %v627
        %v629 = vpop.f32.mrb[0].mxu0
        %630 = vmatprep.mubr.bf16.mxu0 0
        %631 = vmatmul.mubr.bf16.gmra.mrb[0].mxu0 %v472
        %v632 = vpop.f32.mrb[0].mxu0
        %v633 = vadd.f32 %v340, %v632
        %v634 = vpop.f32.mrb[0].mxu0
        %v635 = vpop.f32.mrb[0].mxu0
        %v636 = vadd.f32 %v340, %v635
        %v637 = vpop.f32.mrb[0].mxu0
        %638 = vmatprep.mubr.bf16.mxu0 0
        %639 = vmatmul.mubr.bf16.gmra.mrb[0].mxu0 %v473
        %v640 = vpop.f32.mrb[0].mxu0
        %v641 = vadd.f32 %v340, %v640
        %v642 = vpop.f32.mrb[0].mxu0
        %v643 = vpop.f32.mrb[0].mxu0
        %v644 = vadd.f32 %v340, %v643
        %v645 = vpop.f32.mrb[0].mxu0
        %646 = vmatprep.mubr.bf16.mxu0 0
        %647 = vmatmul.mubr.bf16.gmra.mrb[0].mxu0 %v474
        %v648 = vpop.f32.mrb[0].mxu0
        %v649 = vadd.f32 %v340, %v648
        %v650 = vpop.f32.mrb[0].mxu0
        %v651 = vpop.f32.mrb[0].mxu0
        %v652 = vadd.f32 %v340, %v651
        %v653 = vpop.f32.mrb[0].mxu0
        %654 = vmatprep.mubr.bf16.mxu0 0
        %655 = vmatmul.mubr.bf16.gmra.mrb[0].mxu0 %v475
        %v656 = vpop.f32.mrb[0].mxu0
        %v657 = vadd.f32 %v340, %v656
        %v658 = vpop.f32.mrb[0].mxu0
        %v659 = vpop.f32.mrb[0].mxu0
        %v660 = vadd.f32 %v340, %v659
        %v661 = vpop.f32.mrb[0].mxu0
        %662 = vmatprep.mubr.bf16.mxu0 0
        %663 = vmatmul.mubr.bf16.gmra.mrb[0].mxu0 %v476
        %v664 = vpop.f32.mrb[0].mxu0
        %v665 = vadd.f32 %v340, %v664
        %v666 = vpop.f32.mrb[0].mxu0
        %v667 = vpop.f32.mrb[0].mxu0
        %v668 = vadd.f32 %v340, %v667
        %v669 = vpop.f32.mrb[0].mxu0
        %670 = vmatprep.mubr.bf16.mxu0 0
        %671 = vmatmul.mubr.bf16.gmra.mrb[0].mxu0 %v477
        %v672 = vpop.f32.mrb[0].mxu0
        %v673 = vadd.f32 %v340, %v672
        %v674 = vpop.f32.mrb[0].mxu0
        %v675 = vpop.f32.mrb[0].mxu0
        %v676 = vadd.f32 %v340, %v675
        %v677 = vpop.f32.mrb[0].mxu0
        %678 = vmatprep.mubr.bf16.mxu0 0
        %679 = vmatmul.mubr.bf16.gmra.mrb[0].mxu0 %v478
        %v680 = vpop.f32.mrb[0].mxu0
        %v681 = vadd.f32 %v340, %v680
        %v682 = vpop.f32.mrb[0].mxu0
        %v683 = vpop.f32.mrb[0].mxu0
        %v684 = vadd.f32 %v340, %v683
        %v685 = vpop.f32.mrb[0].mxu0
        %686 = vmatprep.mubr.bf16.mxu0 0
        %687 = vmatmul.mubr.bf16.gmra.mrb[0].mxu0 %v479
        %v688 = vpop.f32.mrb[0].mxu0
        %v689 = vadd.f32 %v340, %v688
        %v690 = vpop.f32.mrb[0].mxu0
        %v691 = vpop.f32.mrb[0].mxu0
        %v692 = vadd.f32 %v340, %v691
        %v693 = vpop.f32.mrb[0].mxu0
        %694 = vmatprep.mubr.bf16.mxu0 0
        %695 = vmatmul.mubr.bf16.gmra.mrb[0].mxu0 %v480
        %v696 = vpop.f32.mrb[0].mxu0
        %v697 = vadd.f32 %v340, %v696
        %v698 = vpop.f32.mrb[0].mxu0
        %v699 = vpop.f32.mrb[0].mxu0
        %v700 = vadd.f32 %v340, %v699
        %v701 = vpop.f32.mrb[0].mxu0
        %702 = vmatprep.mubr.bf16.mxu0 0
        %703 = vmatmul.mubr.bf16.gmra.mrb[0].mxu0 %v481
        %v704 = vpop.f32.mrb[0].mxu0
        %v705 = vadd.f32 %v340, %v704
        %v706 = vpop.f32.mrb[0].mxu0
        %v707 = vpop.f32.mrb[0].mxu0
        %v708 = vadd.f32 %v340, %v707
        %v709 = vpop.f32.mrb[0].mxu0
        %710 = vmatprep.mubr.bf16.mxu0 0
        %711 = vmatmul.mubr.bf16.gmra.mrb[0].mxu0 %v482
        %v712 = vpop.f32.mrb[0].mxu0
        %v713 = vadd.f32 %v340, %v712
        %v714 = vpop.f32.mrb[0].mxu0
        %v715 = vpop.f32.mrb[0].mxu0
        %v716 = vadd.f32 %v340, %v715
        %v717 = vpop.f32.mrb[0].mxu0
        %718 = vmatprep.mubr.bf16.mxu0 0
        %719 = vmatmul.mubr.bf16.gmra.mrb[0].mxu0 %v483
        %v720 = vpop.f32.mrb[0].mxu0
        %v721 = vadd.f32 %v340, %v720
        %v722 = vpop.f32.mrb[0].mxu0
        %v723 = vpop.f32.mrb[0].mxu0
        %v724 = vadd.f32 %v340, %v723
        %v725 = vpop.f32.mrb[0].mxu0
        %726 = vmatprep.mubr.bf16.mxu0 0
        %727 = vmatmul.mubr.bf16.gmra.mrb[0].mxu0 %v484
        %v728 = vpop.f32.mrb[0].mxu0
        %v729 = vadd.f32 %v340, %v728
        %v730 = vpop.f32.mrb[0].mxu0
        %v731 = vpop.f32.mrb[0].mxu0
        %v732 = vadd.f32 %v340, %v731
        %v733 = vpop.f32.mrb[0].mxu0
        %734 = vmatprep.mubr.bf16.mxu0 0
        %735 = vmatmul.mubr.bf16.gmra.mrb[0].mxu0 %v485
        %v736 = vpop.f32.mrb[0].mxu0
        %v737 = vadd.f32 %v340, %v736
        %v738 = vpop.f32.mrb[0].mxu0
        %v739 = vpop.f32.mrb[0].mxu0
        %v740 = vadd.f32 %v340, %v739
        %v741 = vpop.f32.mrb[0].mxu0
        %742 = vmatprep.mubr.bf16.mxu0 0
        %743 = vmatmul.mubr.bf16.gmra.mrb[0].mxu0 %v486
        %v744 = vpop.f32.mrb[0].mxu0
        %v745 = vadd.f32 %v340, %v744
        %v746 = vpop.f32.mrb[0].mxu0
        %v747 = vpop.f32.mrb[0].mxu0
        %v748 = vadd.f32 %v340, %v747
        %v749 = vpop.f32.mrb[0].mxu0
        %750 = vmatprep.mubr.bf16.mxu0 0
        %751 = vmatmul.mubr.bf16.gmra.mrb[0].mxu0 %v487
        %v752 = vpop.f32.mrb[0].mxu0
        %v753 = vadd.f32 %v340, %v752
        %v754 = vpop.f32.mrb[0].mxu0
        %v755 = vpop.f32.mrb[0].mxu0
        %v756 = vadd.f32 %v340, %v755
        %v757 = vpop.f32.mrb[0].mxu0
        %758 = vmatprep.mubr.bf16.mxu0 0
        %759 = vmatmul.mubr.bf16.gmra.mrb[0].mxu0 %v488
        %v760 = vpop.f32.mrb[0].mxu0
        %v761 = vadd.f32 %v340, %v760
        %v762 = vpop.f32.mrb[0].mxu0
        %v763 = vpop.f32.mrb[0].mxu0
        %v764 = vadd.f32 %v340, %v763
        %v765 = vpop.f32.mrb[0].mxu0
        %766 = vmatprep.mubr.bf16.mxu0 0
        %767 = vmatmul.mubr.bf16.gmra.mrb[0].mxu0 %v489
        %v768 = vpop.f32.mrb[0].mxu0
        %v769 = vadd.f32 %v340, %v768
        %v770 = vpop.f32.mrb[0].mxu0
        %v771 = vpop.f32.mrb[0].mxu0
        %v772 = vadd.f32 %v340, %v771
        %v773 = vpop.f32.mrb[0].mxu0
        %774 = vmatprep.mubr.bf16.mxu0 0
        %775 = vmatmul.mubr.bf16.gmra.mrb[0].mxu0 %v490
        %v776 = vpop.f32.mrb[0].mxu0
        %v777 = vadd.f32 %v340, %v776
        %v778 = vpop.f32.mrb[0].mxu0
        %v779 = vpop.f32.mrb[0].mxu0
        %v780 = vadd.f32 %v340, %v779
        %v781 = vpop.f32.mrb[0].mxu0
        %782 = vmatprep.mubr.bf16.mxu0 0
        %783 = vmatmul.mubr.bf16.gmra.mrb[0].mxu0 %v491
        %v784 = vpop.f32.mrb[0].mxu0
        %v785 = vadd.f32 %v340, %v784
        %v786 = vpop.f32.mrb[0].mxu0
        %v787 = vpop.f32.mrb[0].mxu0
        %v788 = vadd.f32 %v340, %v787
        %v789 = vpop.f32.mrb[0].mxu0
        %790 = vmatprep.mubr.bf16.mxu0 0
        %791 = vmatmul.mubr.bf16.gmra.mrb[0].mxu0 %v492
        %v792 = vpop.f32.mrb[0].mxu0
        %v793 = vadd.f32 %v340, %v792
        %v794 = vpop.f32.mrb[0].mxu0
        %v795 = vpop.f32.mrb[0].mxu0
        %v796 = vadd.f32 %v340, %v795
        %v797 = vpop.f32.mrb[0].mxu0
        %798 = vmatprep.mubr.bf16.mxu0 0
        %799 = vmatmul.mubr.bf16.gmra.mrb[0].mxu0 %v493
        %v800 = vpop.f32.mrb[0].mxu0
        %v801 = vadd.f32 %v340, %v800
        %v802 = vpop.f32.mrb[0].mxu0
        %v803 = vpop.f32.mrb[0].mxu0
        %v804 = vadd.f32 %v340, %v803
        %v805 = vpop.f32.mrb[0].mxu0
        %806 = vmatprep.mubr.bf16.mxu0 0
        %807 = vmatmul.mubr.bf16.gmra.mrb[0].mxu0 %v494
        %v808 = vpop.f32.mrb[0].mxu0
        %v809 = vadd.f32 %v340, %v808
        %v810 = vpop.f32.mrb[0].mxu0
        %v811 = vpop.f32.mrb[0].mxu0
        %v812 = vadd.f32 %v340, %v811
        %v813 = vpop.f32.mrb[0].mxu0
        %814 = vmatprep.mubr.bf16.mxu0 0
        %815 = vmatmul.mubr.bf16.gmra.mrb[0].mxu0 %v495
        %v816 = vpop.f32.mrb[0].mxu0
        %v817 = vadd.f32 %v340, %v816
        %v818 = vpop.f32.mrb[0].mxu0
        %v819 = vpop.f32.mrb[0].mxu0
        %v820 = vadd.f32 %v340, %v819
        %v821 = vpop.f32.mrb[0].mxu0
        %822 = vmatprep.mubr.bf16.mxu0 0
        %823 = vmatmul.mubr.bf16.gmra.mrb[0].mxu0 %v496
        %v824 = vpop.f32.mrb[0].mxu0
        %v825 = vadd.f32 %v340, %v824
        %v826 = vpop.f32.mrb[0].mxu0
        %v827 = vpop.f32.mrb[0].mxu0
        %v828 = vadd.f32 %v340, %v827
        %v829 = vpop.f32.mrb[0].mxu0
        %830 = vmatprep.mubr.bf16.mxu0 0
        %831 = vmatmul.mubr.bf16.gmra.mrb[0].mxu0 %v497
        %v832 = vpop.f32.mrb[0].mxu0
        %v833 = vadd.f32 %v340, %v832
        %v834 = vpop.f32.mrb[0].mxu0
        %v835 = vpop.f32.mrb[0].mxu0
        %v836 = vadd.f32 %v340, %v835
        %v837 = vpop.f32.mrb[0].mxu0
        %838 = vmatprep.mubr.bf16.mxu0 0
        %839 = vmatmul.mubr.bf16.gmra.mrb[0].mxu0 %v498
        %v840 = vpop.f32.mrb[0].mxu0
        %v841 = vadd.f32 %v340, %v840
        %v842 = vpop.f32.mrb[0].mxu0
        %v843 = vpop.f32.mrb[0].mxu0
        %v844 = vadd.f32 %v340, %v843
        %v845 = vpop.f32.mrb[0].mxu0
        %846 = vmatprep.mubr.bf16.mxu0 0
        %847 = vmatmul.mubr.bf16.gmra.mrb[0].mxu0 %v499
        %v848 = vpop.f32.mrb[0].mxu0
        %v849 = vadd.f32 %v340, %v848
        %v850 = vpop.f32.mrb[0].mxu0
        %v851 = vpop.f32.mrb[0].mxu0
        %v852 = vadd.f32 %v340, %v851
        %v853 = vpop.f32.mrb[0].mxu0
        %854 = vmatprep.mubr.bf16.mxu0 0
        %855 = vmatmul.mubr.bf16.gmra.mrb[0].mxu0 %v500
        %v856 = vpop.f32.mrb[0].mxu0
        %v857 = vadd.f32 %v340, %v856
        %v858 = vpop.f32.mrb[0].mxu0
        %v859 = vpop.f32.mrb[0].mxu0
        %v860 = vadd.f32 %v340, %v859
        %v861 = vpop.f32.mrb[0].mxu0
        %862 = vmatprep.mubr.bf16.mxu0 0
        %863 = vmatmul.mubr.bf16.gmra.mrb[0].mxu0 %v501
        %v864 = vpop.f32.mrb[0].mxu0
        %v865 = vadd.f32 %v340, %v864
        %v866 = vpop.f32.mrb[0].mxu0
        %v867 = vpop.f32.mrb[0].mxu0
        %v868 = vadd.f32 %v340, %v867
        %v869 = vpop.f32.mrb[0].mxu0
        %870 = vdwg.mxu0
        %v871 = vmul.f32 %v617, 0.5
        %v872 = vmul.f32 %v620, 0.5
        %v873 = vmul.f32 %v625, 0.5
        %v874 = vmul.f32 %v628, 0.5
        %v875 = vmul.f32 %v633, 0.5
        %v876 = vmul.f32 %v636, 0.5
        %v877 = vmul.f32 %v641, 0.5
        %v878 = vmul.f32 %v644, 0.5
        %v879 = vmul.f32 %v649, 0.5
        %v880 = vmul.f32 %v652, 0.5
        %v881 = vmul.f32 %v657, 0.5
        %v882 = vmul.f32 %v660, 0.5
        %v883 = vmul.f32 %v665, 0.5
        %v884 = vmul.f32 %v668, 0.5
        %v885 = vmul.f32 %v673, 0.5
        %v886 = vmul.f32 %v676, 0.5
        %v887 = vmul.f32 %v681, 0.5
        %v888 = vmul.f32 %v684, 0.5
        %v889 = vmul.f32 %v689, 0.5
        %v890 = vmul.f32 %v692, 0.5
        %v891 = vmul.f32 %v697, 0.5
        %v892 = vmul.f32 %v700, 0.5
        %v893 = vmul.f32 %v705, 0.5
        %v894 = vmul.f32 %v708, 0.5
        %v895 = vmul.f32 %v713, 0.5
        %v896 = vmul.f32 %v716, 0.5
        %v897 = vmul.f32 %v721, 0.5
        %v898 = vmul.f32 %v724, 0.5
        %v899 = vmul.f32 %v729, 0.5
        %v900 = vmul.f32 %v732, 0.5
        %v901 = vmul.f32 %v737, 0.5
        %v902 = vmul.f32 %v740, 0.5
        %v903 = vmul.f32 %v745, 0.5
        %v904 = vmul.f32 %v748, 0.5
        %v905 = vmul.f32 %v753, 0.5
        %v906 = vmul.f32 %v756, 0.5
        %v907 = vmul.f32 %v761, 0.5
        %v908 = vmul.f32 %v764, 0.5
        %v909 = vmul.f32 %v769, 0.5
        %v910 = vmul.f32 %v772, 0.5
        %v911 = vmul.f32 %v777, 0.5
        %v912 = vmul.f32 %v780, 0.5
        %v913 = vmul.f32 %v785, 0.5
        %v914 = vmul.f32 %v788, 0.5
        %v915 = vmul.f32 %v793, 0.5
        %v916 = vmul.f32 %v796, 0.5
        %v917 = vmul.f32 %v801, 0.5
        %v918 = vmul.f32 %v804, 0.5
        %v919 = vmul.f32 %v809, 0.5
        %v920 = vmul.f32 %v812, 0.5
        %v921 = vmul.f32 %v817, 0.5
        %v922 = vmul.f32 %v820, 0.5
        %v923 = vmul.f32 %v825, 0.5
        %v924 = vmul.f32 %v828, 0.5
        %v925 = vmul.f32 %v833, 0.5
        %v926 = vmul.f32 %v836, 0.5
        %v927 = vmul.f32 %v841, 0.5
        %v928 = vmul.f32 %v844, 0.5
        %v929 = vmul.f32 %v849, 0.5
        %v930 = vmul.f32 %v852, 0.5
        %v931 = vmul.f32 %v857, 0.5
        %v932 = vmul.f32 %v860, 0.5
        %v933 = vmul.f32 %v865, 0.5
        %v934 = vmul.f32 %v868, 0.5
        %v935 = vmul.f32 %v617, 0.70710677
        %v936 = vmul.f32 %v620, 0.70710677
        %v937 = vmul.f32 %v625, 0.70710677
        %v938 = vmul.f32 %v628, 0.70710677
        %v939 = vmul.f32 %v633, 0.70710677
        %v940 = vmul.f32 %v636, 0.70710677
        %v941 = vmul.f32 %v641, 0.70710677
        %v942 = vmul.f32 %v644, 0.70710677
        %v943 = vmul.f32 %v649, 0.70710677
        %v944 = vmul.f32 %v652, 0.70710677
        %v945 = vmul.f32 %v657, 0.70710677
        %v946 = vmul.f32 %v660, 0.70710677
        %v947 = vmul.f32 %v665, 0.70710677
        %v948 = vmul.f32 %v668, 0.70710677
        %v949 = vmul.f32 %v673, 0.70710677
        %v950 = vmul.f32 %v676, 0.70710677
        %v951 = vmul.f32 %v681, 0.70710677
        %v952 = vmul.f32 %v684, 0.70710677
        %v953 = vmul.f32 %v689, 0.70710677
        %v954 = vmul.f32 %v692, 0.70710677
        %v955 = vmul.f32 %v697, 0.70710677
        %v956 = vmul.f32 %v700, 0.70710677
        %v957 = vmul.f32 %v705, 0.70710677
        %v958 = vmul.f32 %v708, 0.70710677
        %v959 = vmul.f32 %v713, 0.70710677
        %v960 = vmul.f32 %v716, 0.70710677
        %v961 = vmul.f32 %v721, 0.70710677
        %v962 = vmul.f32 %v724, 0.70710677
        %v963 = vmul.f32 %v729, 0.70710677
        %v964 = vmul.f32 %v732, 0.70710677
        %v965 = vmul.f32 %v737, 0.70710677
        %v966 = vmul.f32 %v740, 0.70710677
        %v967 = vmul.f32 %v745, 0.70710677
        %v968 = vmul.f32 %v748, 0.70710677
        %v969 = vmul.f32 %v753, 0.70710677
        %v970 = vmul.f32 %v756, 0.70710677
        %v971 = vmul.f32 %v761, 0.70710677
        %v972 = vmul.f32 %v764, 0.70710677
        %v973 = vmul.f32 %v769, 0.70710677
        %v974 = vmul.f32 %v772, 0.70710677
        %v975 = vmul.f32 %v777, 0.70710677
        %v976 = vmul.f32 %v780, 0.70710677
        %v977 = vmul.f32 %v785, 0.70710677
        %v978 = vmul.f32 %v788, 0.70710677
        %v979 = vmul.f32 %v793, 0.70710677
        %v980 = vmul.f32 %v796, 0.70710677
        %v981 = vmul.f32 %v801, 0.70710677
        %v982 = vmul.f32 %v804, 0.70710677
        %v983 = vmul.f32 %v809, 0.70710677
        %v984 = vmul.f32 %v812, 0.70710677
        %v985 = vmul.f32 %v817, 0.70710677
        %v986 = vmul.f32 %v820, 0.70710677
        %v987 = vmul.f32 %v825, 0.70710677
        %v988 = vmul.f32 %v828, 0.70710677
        %v989 = vmul.f32 %v833, 0.70710677
        %v990 = vmul.f32 %v836, 0.70710677
        %v991 = vmul.f32 %v841, 0.70710677
        %v992 = vmul.f32 %v844, 0.70710677
        %v993 = vmul.f32 %v849, 0.70710677
        %v994 = vmul.f32 %v852, 0.70710677
        %v995 = vmul.f32 %v857, 0.70710677
        %v996 = vmul.f32 %v860, 0.70710677
        %v997 = vmul.f32 %v865, 0.70710677
        %v998 = vmul.f32 %v868, 0.70710677
        %v999 = verf.f32.pop %v935
        %v1000 = verf.f32.pop %v936
        %v1001 = verf.f32.pop %v937
        %v1002 = verf.f32.pop %v938
        %v1003 = verf.f32.pop %v939
        %v1004 = verf.f32.pop %v940
        %v1005 = verf.f32.pop %v941
        %v1006 = verf.f32.pop %v942
        %v1007 = verf.f32.pop %v943
        %v1008 = verf.f32.pop %v944
        %v1009 = verf.f32.pop %v945
        %v1010 = verf.f32.pop %v946
        %v1011 = verf.f32.pop %v947
        %v1012 = verf.f32.pop %v948
        %v1013 = verf.f32.pop %v949
        %v1014 = verf.f32.pop %v950
        %v1015 = verf.f32.pop %v951
        %v1016 = verf.f32.pop %v952
        %v1017 = verf.f32.pop %v953
        %v1018 = verf.f32.pop %v954
        %v1019 = verf.f32.pop %v955
        %v1020 = verf.f32.pop %v956
        %v1021 = verf.f32.pop %v957
        %v1022 = verf.f32.pop %v958
        %v1023 = verf.f32.pop %v959
        %v1024 = verf.f32.pop %v960
        %v1025 = verf.f32.pop %v961
        %v1026 = verf.f32.pop %v962
        %v1027 = verf.f32.pop %v963
        %v1028 = verf.f32.pop %v964
        %v1029 = verf.f32.pop %v965
        %v1030 = verf.f32.pop %v966
        %v1031 = verf.f32.pop %v967
        %v1032 = verf.f32.pop %v968
        %v1033 = verf.f32.pop %v969
        %v1034 = verf.f32.pop %v970
        %v1035 = verf.f32.pop %v971
        %v1036 = verf.f32.pop %v972
        %v1037 = verf.f32.pop %v973
        %v1038 = verf.f32.pop %v974
        %v1039 = verf.f32.pop %v975
        %v1040 = verf.f32.pop %v976
        %v1041 = verf.f32.pop %v977
        %v1042 = verf.f32.pop %v978
        %v1043 = verf.f32.pop %v979
        %v1044 = verf.f32.pop %v980
        %v1045 = verf.f32.pop %v981
        %v1046 = verf.f32.pop %v982
        %v1047 = verf.f32.pop %v983
        %v1048 = verf.f32.pop %v984
        %v1049 = verf.f32.pop %v985
        %v1050 = verf.f32.pop %v986
        %v1051 = verf.f32.pop %v987
        %v1052 = verf.f32.pop %v988
        %v1053 = verf.f32.pop %v989
        %v1054 = verf.f32.pop %v990
        %v1055 = verf.f32.pop %v991
        %v1056 = verf.f32.pop %v992
        %v1057 = verf.f32.pop %v993
        %v1058 = verf.f32.pop %v994
        %v1059 = verf.f32.pop %v995
        %v1060 = verf.f32.pop %v996
        %v1061 = verf.f32.pop %v997
        %v1062 = verf.f32.pop %v998
        %v1063 = vadd.f32 %v999, 1.0
        %v1064 = vadd.f32 %v1000, 1.0
        %v1065 = vadd.f32 %v1001, 1.0
        %v1066 = vadd.f32 %v1002, 1.0
        %v1067 = vadd.f32 %v1003, 1.0
        %v1068 = vadd.f32 %v1004, 1.0
        %v1069 = vadd.f32 %v1005, 1.0
        %v1070 = vadd.f32 %v1006, 1.0
        %v1071 = vadd.f32 %v1007, 1.0
        %v1072 = vadd.f32 %v1008, 1.0
        %v1073 = vadd.f32 %v1009, 1.0
        %v1074 = vadd.f32 %v1010, 1.0
        %v1075 = vadd.f32 %v1011, 1.0
        %v1076 = vadd.f32 %v1012, 1.0
        %v1077 = vadd.f32 %v1013, 1.0
        %v1078 = vadd.f32 %v1014, 1.0
        %v1079 = vadd.f32 %v1015, 1.0
        %v1080 = vadd.f32 %v1016, 1.0
        %v1081 = vadd.f32 %v1017, 1.0
        %v1082 = vadd.f32 %v1018, 1.0
        %v1083 = vadd.f32 %v1019, 1.0
        %v1084 = vadd.f32 %v1020, 1.0
        %v1085 = vadd.f32 %v1021, 1.0
        %v1086 = vadd.f32 %v1022, 1.0
        %v1087 = vadd.f32 %v1023, 1.0
        %v1088 = vadd.f32 %v1024, 1.0
        %v1089 = vadd.f32 %v1025, 1.0
        %v1090 = vadd.f32 %v1026, 1.0
        %v1091 = vadd.f32 %v1027, 1.0
        %v1092 = vadd.f32 %v1028, 1.0
        %v1093 = vadd.f32 %v1029, 1.0
        %v1094 = vadd.f32 %v1030, 1.0
        %v1095 = vadd.f32 %v1031, 1.0
        %v1096 = vadd.f32 %v1032, 1.0
        %v1097 = vadd.f32 %v1033, 1.0
        %v1098 = vadd.f32 %v1034, 1.0
        %v1099 = vadd.f32 %v1035, 1.0
        %v1100 = vadd.f32 %v1036, 1.0
        %v1101 = vadd.f32 %v1037, 1.0
        %v1102 = vadd.f32 %v1038, 1.0
        %v1103 = vadd.f32 %v1039, 1.0
        %v1104 = vadd.f32 %v1040, 1.0
        %v1105 = vadd.f32 %v1041, 1.0
        %v1106 = vadd.f32 %v1042, 1.0
        %v1107 = vadd.f32 %v1043, 1.0
        %v1108 = vadd.f32 %v1044, 1.0
        %v1109 = vadd.f32 %v1045, 1.0
        %v1110 = vadd.f32 %v1046, 1.0
        %v1111 = vadd.f32 %v1047, 1.0
        %v1112 = vadd.f32 %v1048, 1.0
        %v1113 = vadd.f32 %v1049, 1.0
        %v1114 = vadd.f32 %v1050, 1.0
        %v1115 = vadd.f32 %v1051, 1.0
        %v1116 = vadd.f32 %v1052, 1.0
        %v1117 = vadd.f32 %v1053, 1.0
        %v1118 = vadd.f32 %v1054, 1.0
        %v1119 = vadd.f32 %v1055, 1.0
        %v1120 = vadd.f32 %v1056, 1.0
        %v1121 = vadd.f32 %v1057, 1.0
        %v1122 = vadd.f32 %v1058, 1.0
        %v1123 = vadd.f32 %v1059, 1.0
        %v1124 = vadd.f32 %v1060, 1.0
        %v1125 = vadd.f32 %v1061, 1.0
        %v1126 = vadd.f32 %v1062, 1.0
        %v1127 = vmul.f32 %v871, %v1063
        %v1128 = vmul.f32 %v872, %v1064
        %v1129 = vmul.f32 %v873, %v1065
        %v1130 = vmul.f32 %v874, %v1066
        %v1131 = vmul.f32 %v875, %v1067
        %v1132 = vmul.f32 %v876, %v1068
        %v1133 = vmul.f32 %v877, %v1069
        %v1134 = vmul.f32 %v878, %v1070
        %v1135 = vmul.f32 %v879, %v1071
        %v1136 = vmul.f32 %v880, %v1072
        %v1137 = vmul.f32 %v881, %v1073
        %v1138 = vmul.f32 %v882, %v1074
        %v1139 = vmul.f32 %v883, %v1075
        %v1140 = vmul.f32 %v884, %v1076
        %v1141 = vmul.f32 %v885, %v1077
        %v1142 = vmul.f32 %v886, %v1078
        %v1143 = vmul.f32 %v887, %v1079
        %v1144 = vmul.f32 %v888, %v1080
        %v1145 = vmul.f32 %v889, %v1081
        %v1146 = vmul.f32 %v890, %v1082
        %v1147 = vmul.f32 %v891, %v1083
        %v1148 = vmul.f32 %v892, %v1084
        %v1149 = vmul.f32 %v893, %v1085
        %v1150 = vmul.f32 %v894, %v1086
        %v1151 = vmul.f32 %v895, %v1087
        %v1152 = vmul.f32 %v896, %v1088
        %v1153 = vmul.f32 %v897, %v1089
        %v1154 = vmul.f32 %v898, %v1090
        %v1155 = vmul.f32 %v899, %v1091
        %v1156 = vmul.f32 %v900, %v1092
        %v1157 = vmul.f32 %v901, %v1093
        %v1158 = vmul.f32 %v902, %v1094
        %v1159 = vmul.f32 %v903, %v1095
        %v1160 = vmul.f32 %v904, %v1096
        %v1161 = vmul.f32 %v905, %v1097
        %v1162 = vmul.f32 %v906, %v1098
        %v1163 = vmul.f32 %v907, %v1099
        %v1164 = vmul.f32 %v908, %v1100
        %v1165 = vmul.f32 %v909, %v1101
        %v1166 = vmul.f32 %v910, %v1102
        %v1167 = vmul.f32 %v911, %v1103
        %v1168 = vmul.f32 %v912, %v1104
        %v1169 = vmul.f32 %v913, %v1105
        %v1170 = vmul.f32 %v914, %v1106
        %v1171 = vmul.f32 %v915, %v1107
        %v1172 = vmul.f32 %v916, %v1108
        %v1173 = vmul.f32 %v917, %v1109
        %v1174 = vmul.f32 %v918, %v1110
        %v1175 = vmul.f32 %v919, %v1111
        %v1176 = vmul.f32 %v920, %v1112
        %v1177 = vmul.f32 %v921, %v1113
        %v1178 = vmul.f32 %v922, %v1114
        %v1179 = vmul.f32 %v923, %v1115
        %v1180 = vmul.f32 %v924, %v1116
        %v1181 = vmul.f32 %v925, %v1117
        %v1182 = vmul.f32 %v926, %v1118
        %v1183 = vmul.f32 %v927, %v1119
        %v1184 = vmul.f32 %v928, %v1120
        %v1185 = vmul.f32 %v929, %v1121
        %v1186 = vmul.f32 %v930, %v1122
        %v1187 = vmul.f32 %v931, %v1123
        %v1188 = vmul.f32 %v932, %v1124
        %v1189 = vmul.f32 %v933, %v1125
        %v1190 = vmul.f32 %v934, %v1126
        %v1191 = vpack.c.bf16 %v1128, %v1127
        %v1192 = vpack.c.bf16 %v1130, %v1129
        %v1193 = vpack.c.bf16 %v1132, %v1131
        %v1194 = vpack.c.bf16 %v1134, %v1133
        %v1195 = vpack.c.bf16 %v1136, %v1135
        %v1196 = vpack.c.bf16 %v1138, %v1137
        %v1197 = vpack.c.bf16 %v1140, %v1139
        %v1198 = vpack.c.bf16 %v1142, %v1141
        %v1199 = vpack.c.bf16 %v1144, %v1143
        %v1200 = vpack.c.bf16 %v1146, %v1145
        %v1201 = vpack.c.bf16 %v1148, %v1147
        %v1202 = vpack.c.bf16 %v1150, %v1149
        %v1203 = vpack.c.bf16 %v1152, %v1151
        %v1204 = vpack.c.bf16 %v1154, %v1153
        %v1205 = vpack.c.bf16 %v1156, %v1155
        %v1206 = vpack.c.bf16 %v1158, %v1157
        %v1207 = vpack.c.bf16 %v1160, %v1159
        %v1208 = vpack.c.bf16 %v1162, %v1161
        %v1209 = vpack.c.bf16 %v1164, %v1163
        %v1210 = vpack.c.bf16 %v1166, %v1165
        %v1211 = vpack.c.bf16 %v1168, %v1167
        %v1212 = vpack.c.bf16 %v1170, %v1169
        %v1213 = vpack.c.bf16 %v1172, %v1171
        %v1214 = vpack.c.bf16 %v1174, %v1173
        %v1215 = vpack.c.bf16 %v1176, %v1175
        %v1216 = vpack.c.bf16 %v1178, %v1177
        %v1217 = vpack.c.bf16 %v1180, %v1179
        %v1218 = vpack.c.bf16 %v1182, %v1181
        %v1219 = vpack.c.bf16 %v1184, %v1183
        %v1220 = vpack.c.bf16 %v1186, %v1185
        %v1221 = vpack.c.bf16 %v1188, %v1187
        %v1222 = vpack.c.bf16 %v1190, %v1189
        %v1255 = vunpack.c.l.b16 %v1191
        %v1256 = vunpack.c.h.b16 %v1191
        %v1257 = vunpack.c.l.b16 %v1192
        %v1258 = vunpack.c.h.b16 %v1192
        %v1259 = vunpack.c.l.b16 %v1193
        %v1260 = vunpack.c.h.b16 %v1193
        %v1261 = vunpack.c.l.b16 %v1194
        %v1262 = vunpack.c.h.b16 %v1194
        %v1263 = vunpack.c.l.b16 %v1195
        %v1264 = vunpack.c.h.b16 %v1195
        %v1265 = vunpack.c.l.b16 %v1196
        %v1266 = vunpack.c.h.b16 %v1196
        %v1267 = vunpack.c.l.b16 %v1197
        %v1268 = vunpack.c.h.b16 %v1197
        %v1269 = vunpack.c.l.b16 %v1198
        %v1270 = vunpack.c.h.b16 %v1198
        %v1271 = vunpack.c.l.b16 %v1199
        %v1272 = vunpack.c.h.b16 %v1199
        %v1273 = vunpack.c.l.b16 %v1200
        %v1274 = vunpack.c.h.b16 %v1200
        %v1275 = vunpack.c.l.b16 %v1201
        %v1276 = vunpack.c.h.b16 %v1201
        %v1277 = vunpack.c.l.b16 %v1202
        %v1278 = vunpack.c.h.b16 %v1202
        %v1279 = vunpack.c.l.b16 %v1203
        %v1280 = vunpack.c.h.b16 %v1203
        %v1281 = vunpack.c.l.b16 %v1204
        %v1282 = vunpack.c.h.b16 %v1204
        %v1283 = vunpack.c.l.b16 %v1205
        %v1284 = vunpack.c.h.b16 %v1205
        %v1285 = vunpack.c.l.b16 %v1206
        %v1286 = vunpack.c.h.b16 %v1206
        %v1287 = vunpack.c.l.b16 %v1207
        %v1288 = vunpack.c.h.b16 %v1207
        %v1289 = vunpack.c.l.b16 %v1208
        %v1290 = vunpack.c.h.b16 %v1208
        %v1291 = vunpack.c.l.b16 %v1209
        %v1292 = vunpack.c.h.b16 %v1209
        %v1293 = vunpack.c.l.b16 %v1210
        %v1294 = vunpack.c.h.b16 %v1210
        %v1295 = vunpack.c.l.b16 %v1211
        %v1296 = vunpack.c.h.b16 %v1211
        %v1297 = vunpack.c.l.b16 %v1212
        %v1298 = vunpack.c.h.b16 %v1212
        %v1299 = vunpack.c.l.b16 %v1213
        %v1300 = vunpack.c.h.b16 %v1213
        %v1301 = vunpack.c.l.b16 %v1214
        %v1302 = vunpack.c.h.b16 %v1214
        %v1303 = vunpack.c.l.b16 %v1215
        %v1304 = vunpack.c.h.b16 %v1215
        %v1305 = vunpack.c.l.b16 %v1216
        %v1306 = vunpack.c.h.b16 %v1216
        %v1307 = vunpack.c.l.b16 %v1217
        %v1308 = vunpack.c.h.b16 %v1217
        %v1309 = vunpack.c.l.b16 %v1218
        %v1310 = vunpack.c.h.b16 %v1218
        %v1311 = vunpack.c.l.b16 %v1219
        %v1312 = vunpack.c.h.b16 %v1219
        %v1313 = vunpack.c.l.b16 %v1220
        %v1314 = vunpack.c.h.b16 %v1220
        %v1315 = vunpack.c.l.b16 %v1221
        %v1316 = vunpack.c.h.b16 %v1221
        %v1317 = vunpack.c.l.b16 %v1222
        %v1318 = vunpack.c.h.b16 %v1222
        %v1319 = vpack.c.b16 %v1255, %v1255
        %v1320 = vpack.c.b16 %v1256, %v1256
        %v1321 = vpack.c.b16 %v1257, %v1257
        %v1322 = vpack.c.b16 %v1258, %v1258
        %v1323 = vpack.c.b16 %v1259, %v1259
        %v1324 = vpack.c.b16 %v1260, %v1260
        %v1325 = vpack.c.b16 %v1261, %v1261
        %v1326 = vpack.c.b16 %v1262, %v1262
        %v1327 = vpack.c.b16 %v1263, %v1263
        %v1328 = vpack.c.b16 %v1264, %v1264
        %v1329 = vpack.c.b16 %v1265, %v1265
        %v1330 = vpack.c.b16 %v1266, %v1266
        %v1331 = vpack.c.b16 %v1267, %v1267
        %v1332 = vpack.c.b16 %v1268, %v1268
        %v1333 = vpack.c.b16 %v1269, %v1269
        %v1334 = vpack.c.b16 %v1270, %v1270
        %v1335 = vpack.c.b16 %v1271, %v1271
        %v1336 = vpack.c.b16 %v1272, %v1272
        %v1337 = vpack.c.b16 %v1273, %v1273
        %v1338 = vpack.c.b16 %v1274, %v1274
        %v1339 = vpack.c.b16 %v1275, %v1275
        %v1340 = vpack.c.b16 %v1276, %v1276
        %v1341 = vpack.c.b16 %v1277, %v1277
        %v1342 = vpack.c.b16 %v1278, %v1278
        %v1343 = vpack.c.b16 %v1279, %v1279
        %v1344 = vpack.c.b16 %v1280, %v1280
        %v1345 = vpack.c.b16 %v1281, %v1281
        %v1346 = vpack.c.b16 %v1282, %v1282
        %v1347 = vpack.c.b16 %v1283, %v1283
        %v1348 = vpack.c.b16 %v1284, %v1284
        %v1349 = vpack.c.b16 %v1285, %v1285
        %v1350 = vpack.c.b16 %v1286, %v1286
        %v1351 = vpack.c.b16 %v1287, %v1287
        %v1352 = vpack.c.b16 %v1288, %v1288
        %v1353 = vpack.c.b16 %v1289, %v1289
        %v1354 = vpack.c.b16 %v1290, %v1290
        %v1355 = vpack.c.b16 %v1291, %v1291
        %v1356 = vpack.c.b16 %v1292, %v1292
        %v1357 = vpack.c.b16 %v1293, %v1293
        %v1358 = vpack.c.b16 %v1294, %v1294
        %v1359 = vpack.c.b16 %v1295, %v1295
        %v1360 = vpack.c.b16 %v1296, %v1296
        %v1361 = vpack.c.b16 %v1297, %v1297
        %v1362 = vpack.c.b16 %v1298, %v1298
        %v1363 = vpack.c.b16 %v1299, %v1299
        %v1364 = vpack.c.b16 %v1300, %v1300
        %v1365 = vpack.c.b16 %v1301, %v1301
        %v1366 = vpack.c.b16 %v1302, %v1302
        %v1367 = vpack.c.b16 %v1303, %v1303
        %v1368 = vpack.c.b16 %v1304, %v1304
        %v1369 = vpack.c.b16 %v1305, %v1305
        %v1370 = vpack.c.b16 %v1306, %v1306
        %v1371 = vpack.c.b16 %v1307, %v1307
        %v1372 = vpack.c.b16 %v1308, %v1308
        %v1373 = vpack.c.b16 %v1309, %v1309
        %v1374 = vpack.c.b16 %v1310, %v1310
        %v1375 = vpack.c.b16 %v1311, %v1311
        %v1376 = vpack.c.b16 %v1312, %v1312
        %v1377 = vpack.c.b16 %v1313, %v1313
        %v1378 = vpack.c.b16 %v1314, %v1314
        %v1379 = vpack.c.b16 %v1315, %v1315
        %v1380 = vpack.c.b16 %v1316, %v1316
        %v1381 = vpack.c.b16 %v1317, %v1317
        %v1382 = vpack.c.b16 %v1318, %v1318
        %1447 = vst [vmem:[%s248] sm:$0xf] %v1319
        %1448 = vst [vmem:[%s248 + $0x4] sm:$0xf] %v1320
        %1449 = vst [vmem:[%s248 + $0x8] sm:$0xf] %v1321
        %1450 = vst [vmem:[%s248 + $0xc] sm:$0xf] %v1322
        %1451 = vst [vmem:[%s248 + $0x10] sm:$0xf] %v1323
        %1452 = vst [vmem:[%s248 + $0x14] sm:$0xf] %v1324
        %1453 = vst [vmem:[%s248 + $0x18] sm:$0xf] %v1325
        %1454 = vst [vmem:[%s248 + $0x1c] sm:$0xf] %v1326
        %1455 = vst [vmem:[%s248 + $0x20] sm:$0xf] %v1327
        %1456 = vst [vmem:[%s248 + $0x24] sm:$0xf] %v1328
        %1457 = vst [vmem:[%s248 + $0x28] sm:$0xf] %v1329
        %1458 = vst [vmem:[%s248 + $0x2c] sm:$0xf] %v1330
        %1459 = vst [vmem:[%s248 + $0x30] sm:$0xf] %v1331
        %1460 = vst [vmem:[%s248 + $0x34] sm:$0xf] %v1332
        %1461 = vst [vmem:[%s248 + $0x38] sm:$0xf] %v1333
        %1462 = vst [vmem:[%s248 + $0x3c] sm:$0xf] %v1334
        %1463 = vst [vmem:[%s248 + $0x40] sm:$0xf] %v1335
        %1464 = vst [vmem:[%s248 + $0x44] sm:$0xf] %v1336
        %1465 = vst [vmem:[%s248 + $0x48] sm:$0xf] %v1337
        %1466 = vst [vmem:[%s248 + $0x4c] sm:$0xf] %v1338
        %1467 = vst [vmem:[%s248 + $0x50] sm:$0xf] %v1339
        %1468 = vst [vmem:[%s248 + $0x54] sm:$0xf] %v1340
        %1469 = vst [vmem:[%s248 + $0x58] sm:$0xf] %v1341
        %1470 = vst [vmem:[%s248 + $0x5c] sm:$0xf] %v1342
        %1471 = vst [vmem:[%s248 + $0x60] sm:$0xf] %v1343
        %1472 = vst [vmem:[%s248 + $0x64] sm:$0xf] %v1344
        %1473 = vst [vmem:[%s248 + $0x68] sm:$0xf] %v1345
        %1474 = vst [vmem:[%s248 + $0x6c] sm:$0xf] %v1346
        %1475 = vst [vmem:[%s248 + $0x70] sm:$0xf] %v1347
        %1476 = vst [vmem:[%s248 + $0x74] sm:$0xf] %v1348
        %1477 = vst [vmem:[%s248 + $0x78] sm:$0xf] %v1349
        %1478 = vst [vmem:[%s248 + $0x7c] sm:$0xf] %v1350
        %1479 = vst [vmem:[%s248 + $0x80] sm:$0xf] %v1351
        %1480 = vst [vmem:[%s248 + $0x84] sm:$0xf] %v1352
        %1481 = vst [vmem:[%s248 + $0x88] sm:$0xf] %v1353
        %1482 = vst [vmem:[%s248 + $0x8c] sm:$0xf] %v1354
        %1483 = vst [vmem:[%s248 + $0x90] sm:$0xf] %v1355
        %1484 = vst [vmem:[%s248 + $0x94] sm:$0xf] %v1356
        %1485 = vst [vmem:[%s248 + $0x98] sm:$0xf] %v1357
        %1486 = vst [vmem:[%s248 + $0x9c] sm:$0xf] %v1358
        %1487 = vst [vmem:[%s248 + $0xa0] sm:$0xf] %v1359
        %1488 = vst [vmem:[%s248 + $0xa4] sm:$0xf] %v1360
        %1489 = vst [vmem:[%s248 + $0xa8] sm:$0xf] %v1361
        %1490 = vst [vmem:[%s248 + $0xac] sm:$0xf] %v1362
        %1491 = vst [vmem:[%s248 + $0xb0] sm:$0xf] %v1363
        %1492 = vst [vmem:[%s248 + $0xb4] sm:$0xf] %v1364
        %1493 = vst [vmem:[%s248 + $0xb8] sm:$0xf] %v1365
        %1494 = vst [vmem:[%s248 + $0xbc] sm:$0xf] %v1366
        %1495 = vst [vmem:[%s248 + $0xc0] sm:$0xf] %v1367
        %1496 = vst [vmem:[%s248 + $0xc4] sm:$0xf] %v1368
        %1497 = vst [vmem:[%s248 + $0xc8] sm:$0xf] %v1369
        %1498 = vst [vmem:[%s248 + $0xcc] sm:$0xf] %v1370
        %1499 = vst [vmem:[%s248 + $0xd0] sm:$0xf] %v1371
        %1500 = vst [vmem:[%s248 + $0xd4] sm:$0xf] %v1372
        %1501 = vst [vmem:[%s248 + $0xd8] sm:$0xf] %v1373
        %1502 = vst [vmem:[%s248 + $0xdc] sm:$0xf] %v1374
        %1503 = vst [vmem:[%s248 + $0xe0] sm:$0xf] %v1375
        %1504 = vst [vmem:[%s248 + $0xe4] sm:$0xf] %v1376
        %1505 = vst [vmem:[%s248 + $0xe8] sm:$0xf] %v1377
        %1506 = vst [vmem:[%s248 + $0xec] sm:$0xf] %v1378
        %1507 = vst [vmem:[%s248 + $0xf0] sm:$0xf] %v1379
        %1508 = vst [vmem:[%s248 + $0xf4] sm:$0xf] %v1380
        %1509 = vst [vmem:[%s248 + $0xf8] sm:$0xf] %v1381
        %1510 = vst [vmem:[%s248 + $0xfc] sm:$0xf] %v1382
        %s1511 = sand.u32 %s132, 1
        %s1512 = scalar_lea.sflag [#allocation4], %s1511
        %s1513 = sand.u32 %s132, 1
        %s1514 = smul.addr %s1513, 256
        %s1515 = scalar_lea.vmem [#allocation7], %s1514
        // Predicated region
        $region41: #{tpu_custom_call.1} parent=31 // pred_check
          %p1516 = pneg %p142
        $region42: #{tpu_custom_call.1} parent=31 // pred_check_branch
          %1518 = sbr.rel (%p1516) target = $region44
        $region43: #{tpu_custom_call.1} parent=31 // pred_region
          %s1519 = smul.u32 64, %s27
          %s1521 = ssub.s32 4096, 4096
          %1522 = vsyncadd %s1512, %s1521
          %s1523 = sadd.s32 %s28, %s1519
          %s1524 = smul.addr %s26, 128
          %s1525 = sadd.s32 %s1523, %s1524
          %s1526 = smul.addr %s1525, 64
          %s1527 = scalar_lea.hbm %s3, %s1526
          %s1528 = sshll.u32 %s1515, 4
          %s1529 = int_to_ptr.vmem [resolvable:$true] %s1528
          %1534 = dma.vmem_to_hbm [thread:$0]  %s1529, 4096, %s1527, %s1512, 64, 64, 4
        $region44: #{tpu_custom_call.1} parent=31 // pred_fallthru
          _
      $region32: #{tpu_custom_call.1} parent=5 // pred_fallthru
        _
      %p1535 = scmp.le.s32.totalorder 2, %s16
      // Predicated region
      $region45: #{tpu_custom_call.1} parent=5 // pred_check
        %p1536 = pneg %p1535
      $region46: #{tpu_custom_call.1} parent=5 // pred_check_branch
        %1538 = sbr.rel (%p1536) target = $region48
      $region47: #{tpu_custom_call.1} parent=5 // pred_region
        %s1539 = ssub.s32 %s16, 2
        // Predicated region
        $region49: #{tpu_custom_call.1} parent=47 // pred_check
          %p1540 = pneg %p148
        $region50: #{tpu_custom_call.1} parent=47 // pred_check_branch
          %1542 = sbr.rel (%p1540) target = $region52
        $region51: #{tpu_custom_call.1} parent=47 // pred_region
          %s1543 = sand.u32 %s133, 1
          %s1544 = scalar_lea.sflag [#allocation4], %s1543
          %s1545 = sand.u32 %s133, 1
          %s1546 = smul.addr %s1545, 256
          %s1547 = scalar_lea.vmem [#allocation7], %s1546
          %1548 = dma.done %s1544, 4096
        $region52: #{tpu_custom_call.1} parent=47 // pred_fallthru
          _
      $region48: #{tpu_custom_call.1} parent=5 // pred_fallthru
        _
    $region6: #{tpu_custom_call.1} parent=1 // loop_footer
      %s20 = sadd.s32 1, %s16
    $region7: #{tpu_custom_call.1} parent=1 // loop_footer_branch
      %15 = sbr.rel target = $region3
    $region8: #{tpu_custom_call.1} parent=1 // loop_exit
      _
    %1549 = vsyncpa [#allocation3], 1
    %s1550 = scalar_lea.sflag [#allocation3], 1
    %1551 = vsyncpa %s1550, 1
    %1552 = vsyncpa [#allocation6], 1
    %1553 = vsyncpa [#allocation4], 1
    %s1554 = scalar_lea.sflag [#allocation4], 1
    %1555 = vsyncpa %s1554, 1

</llo_original>
